<compile_context>
chip_gen: v6e
topology: v6e:2x2x1
jax: 0.10.0
libtpu: 0.0.40
codegen_flags: <defaults>
</compile_context>

<pallas_src>
import jax
import jax.numpy as jnp
from jax import lax
from jax.experimental import pallas as pl
from jax.experimental.pallas import tpu as pltpu

_EPS = 1e-6  # matches nn.CosineSimilarity(dim=1, eps=1e-06)


def _round_up(x, m):
    return (x + m - 1) // m * m


# ---------------------------------------------------------------------------
# Fused kernel: linear encoder (x and y) + cosine-loss epilogue.
# grid = (row tiles i, K tiles k);  K is the reduction (inner) axis.
# ---------------------------------------------------------------------------
def _make_clip_cos_loss_kernel(tm, n_rows, eps):
    eps2 = eps * eps

    def kernel(x_ref, y_ref, w_ref, b_ref, o_ref, acc_x_ref, acc_y_ref):
        # All grid-position reads hoisted to the top level (never call
        # pl.program_id / pl.num_programs inside a pl.when body).
        i = pl.program_id(0)
        k = pl.program_id(1)
        nk = pl.num_programs(1)

        @pl.when(k == 0)
        def _init_x():
            acc_x_ref[...] = jnp.zeros_like(acc_x_ref)

        @pl.when(jnp.logical_and(i == 0, k == 0))
        def _init_y():
            acc_y_ref[...] = jnp.zeros_like(acc_y_ref)

        # One weight-tile load feeds both matmuls; cast to bf16 on-chip.
        w = w_ref[...].astype(jnp.bfloat16)                     # (tk, Dp)
        acc_x_ref[...] += jnp.dot(x_ref[...].astype(jnp.bfloat16), w,
                                  preferred_element_type=jnp.float32)

        # Encode the single target y only while processing the first row tile;
        # acc_y scratch persists across the sequential ("arbitrary") N axis.
        @pl.when(i == 0)
        def _y_dot():
            acc_y_ref[...] += jnp.dot(y_ref[...].astype(jnp.bfloat16), w,
                                      preferred_element_type=jnp.float32)

        @pl.when(k == nk - 1)
        def _finalize():
            b = b_ref[...]                                      # (1, Dp) f32
            xe = acc_x_ref[...] + b                             # (tm, Dp)
            ye = acc_y_ref[...] + b                             # (1, Dp)
            # Runs once per row tile; plain VPU/XLU reductions + EUP rsqrt.
            w12 = jnp.sum(xe * ye, axis=1, keepdims=True)       # (tm, 1)
            w1 = jnp.sum(xe * xe, axis=1, keepdims=True)        # (tm, 1)
            w2 = jnp.sum(ye * ye, axis=1, keepdims=True)        # (1, 1)
            inv = lax.rsqrt(jnp.maximum(w1 * w2, eps2))
            z = 1.0 - w12 * inv                                 # (tm, 1)
            # Mask batch-padding rows so they don't contribute to the mean.
            row = i * tm + lax.broadcasted_iota(jnp.int32, (tm, 1), 0)
            z = jnp.where(row < n_rows, z, 0.0)
            # Lane-dense partial-sum store for this row tile.
            o_ref[...] = jnp.broadcast_to(jnp.sum(z), (1, 8, 128)).astype(jnp.float32)

    return kernel


# ---------------------------------------------------------------------------
# CLIPLoss forward (metric='cos', reduce=True)
# ---------------------------------------------------------------------------
def clip_loss_forward(x, y, w, b):
    """x: (N,C,H,W); y: (1,C,H,W) single target; w: (C*H*W, D); b: (D,)."""
    if y.shape[0] != 1:
        raise RuntimeError("Target should be a single sample.")
    n = x.shape[0]
    k_dim, d = w.shape

    x_flat = x.reshape(n, -1).astype(jnp.float32)   # reshape is copy-free
    y_flat = y.reshape(1, -1).astype(jnp.float32)
    assert x_flat.shape[1] == k_dim

    d_pad = _round_up(d, 128)                       # lane-dense embeddings

    # ---- K tile: largest candidate <= 4096 that divides K (no K-pad copy). ----
    tk = None
    for cand in (4096, 3584, 3072, 2560, 2048, 1792, 1536, 1280,
                 1024, 896, 768, 640, 512, 384, 256, 128):
        if k_dim % cand == 0:
            tk = cand
            break
    if tk is None:
        tk = min(4096, _round_up(k_dim, 128))       # padding copy unavoidable

    # ---- M tile: W streams exactly once when the whole batch fits one tile. ----
    TM_CAP = 1024
    tm = n if n <= TM_CAP else 512                  # 512 is a multiple of 16

    # ---- VMEM budget (<~40 MiB so even v7x's 64 MiB physical VMEM has slack). --
    def vmem_bytes(tm_, tk_):
        return (2 * tm_ * tk_ * 4                   # x double-buffer (f32)
                + 2 * tk_ * d_pad * 4               # W double-buffer (conservative f32)
                + 2 * tk_ * 4 + 2 * d_pad * 4       # y, b double-buffers
                + 2 * 8 * 128 * 4                   # output block
                + tm_ * d_pad * 4 + d_pad * 4)      # accumulators

    BUDGET = 40 * 1024 * 1024
    while vmem_bytes(tm, tk) > BUDGET and tk > 512:
        tk //= 2                                    # halving preserves divisibility
    while vmem_bytes(tm, tk) > BUDGET and tm > 16:
        tm = max(16, _round_up(tm // 2, 16))

    k_pad = _round_up(k_dim, tk)
    n_pad = _round_up(n, tm)
    grid_n = n_pad // tm
    grid_k = k_pad // tk

    # ---- x stays f32 (single HBM read; bf16 cast happens in-kernel). ----
    if n_pad != n or k_pad != k_dim:
        x_in = jnp.pad(x_flat, ((0, n_pad - n), (0, k_pad - k_dim)))
    else:
        x_in = x_flat
    y_in = (jnp.pad(y_flat, ((0, 0), (0, k_pad - k_dim)))
            if k_pad != k_dim else y_flat)

    # ---- W: pre-cast to bf16 only if re-read (grid_n >= 2) or a pad copy is
    #         unavoidable; otherwise it streams once in f32. ----
    needs_w_pad = (k_pad != k_dim) or (d_pad != d)
    w_in = w.astype(jnp.bfloat16) if (grid_n >= 2 or needs_w_pad) else w.astype(jnp.float32)
    if needs_w_pad:
        w_in = jnp.pad(w_in, ((0, k_pad - k_dim), (0, d_pad - d)))

    b_in = jnp.pad(b.astype(jnp.float32).reshape(1, d), ((0, 0), (0, d_pad - d)))

    kernel = _make_clip_cos_loss_kernel(tm, n, _EPS)

    vmem_limit = min(48 * 1024 * 1024,
                     max(32 * 1024 * 1024, vmem_bytes(tm, tk) + 8 * 1024 * 1024))

    partial = pl.pallas_call(
        kernel,
        out_shape=jax.ShapeDtypeStruct((grid_n, 8, 128), jnp.float32),
        grid_spec=pltpu.PrefetchScalarGridSpec(
            num_scalar_prefetch=0,
            grid=(grid_n, grid_k),
            in_specs=[
                pl.BlockSpec((tm, tk), lambda i, k: (i, k)),       # x rows (f32)
                pl.BlockSpec((1, tk), lambda i, k: (0, k)),        # y target
                pl.BlockSpec((tk, d_pad), lambda i, k: (k, 0)),    # encoder W
                pl.BlockSpec((1, d_pad), lambda i, k: (0, 0)),     # encoder bias
            ],
            out_specs=pl.BlockSpec((1, 8, 128), lambda i, k: (i, 0, 0)),
            scratch_shapes=[
                pltpu.VMEM((tm, d_pad), jnp.float32),   # x-embedding accumulator
                pltpu.VMEM((1, d_pad), jnp.float32),    # y-embedding accumulator
            ],
        ),
        compiler_params=pltpu.CompilerParams(
            # N must be 'arbitrary' (sequential) because acc_y from the first row
            # tile is reused by later row tiles.
            dimension_semantics=("arbitrary", "arbitrary"),
            vmem_limit_bytes=vmem_limit,
        ),
    )(x_in, y_in, w_in, b_in)

    # Tiny final reduce over the (few) row tiles + mean over the real batch.
    return jnp.sum(partial[:, 0, 0]) / n


if __name__ == "__main__":
    # Small shapes consistent with an image encoder: batch=2, C=4, H=W=16, D=32.
    N, C, H, W, D = 2, 4, 16, 16, 32
    K = C * H * W

    key = jax.random.PRNGKey(0)
    kx, ky, kw, kb = jax.random.split(key, 4)
    x = jax.random.normal(kx, (N, C, H, W), dtype=jnp.float32)   # input batch
    y = jax.random.normal(ky, (1, C, H, W), dtype=jnp.float32)   # single target
    enc_w = 0.02 * jax.random.normal(kw, (K, D), dtype=jnp.float32)
    enc_b = 0.01 * jax.random.normal(kb, (D,), dtype=jnp.float32)

    loss = jax.block_until_ready(jax.jit(clip_loss_forward)(x, y, enc_w, enc_b))
    assert loss.shape == (), f"expected scalar loss, got {loss.shape}"

    # Sanity check against a pure-JAX f32 reference (bf16 MXU inputs -> loose tol).
    def _ref_loss(x, y, w, b):
        xe = x.reshape(x.shape[0], -1) @ w + b
        ye = y.reshape(1, -1) @ w + b
        w12 = jnp.sum(xe * ye, axis=1)
        w1 = jnp.sum(xe * xe, axis=1)
        w2 = jnp.sum(ye * ye, axis=1)
        cos = w12 * lax.rsqrt(jnp.maximum(w1 * w2, _EPS * _EPS))
        return jnp.mean(1.0 - cos)

    ref = jax.block_until_ready(_ref_loss(x, y, enc_w, enc_b))
    assert abs(float(loss) - float(ref)) < 3e-2, (float(loss), float(ref))
    print("KERNEL_OK")
</pallas_src>

<mosaic_0001>
module attributes {stable_mosaic.version = 11 : i64} {
  func.func @kernel(%arg0: i32, %arg1: i32, %arg2: memref<2x1024xf32, #tpu.memory_space<vmem>>, %arg3: memref<1x1024xf32, #tpu.memory_space<vmem>>, %arg4: memref<1024x128xbf16, #tpu.memory_space<vmem>>, %arg5: memref<1x128xf32, #tpu.memory_space<vmem>>, %arg6: memref<1x8x128xf32, #tpu.memory_space<vmem>>, %arg7: memref<2x128xf32, #tpu.memory_space<vmem>>, %arg8: memref<1x128xf32, #tpu.memory_space<vmem>>) attributes {dimension_semantics = [#tpu.dimension_semantics<arbitrary>, #tpu.dimension_semantics<arbitrary>], iteration_bounds = array<i64: 1, 1>, scalar_prefetch = 0 : i64, scratch_operands = 2 : i64, tpu.core_type = #tpu.core_type<tc>, window_params = [{transform_indices = @transform_0, window_bounds = array<i64: 2, 1024>}, {transform_indices = @transform_1, window_bounds = array<i64: 1, 1024>}, {transform_indices = @transform_2, window_bounds = array<i64: 1024, 128>}, {pipeline_mode = #tpu.pipeline_mode<synchronous>, transform_indices = @transform_3, window_bounds = array<i64: 1, 128>}, {transform_indices = @transform_4, window_bounds = array<i64: 1, 8, 128>}]} {
    %c0_i32 = arith.constant 0 : i32
    %0 = arith.cmpi eq, %arg1, %c0_i32 : i32
    %1 = arith.extui %0 : i1 to i32
    %c0_i32_0 = arith.constant 0 : i32
    %2 = arith.cmpi ne, %1, %c0_i32_0 : i32
    scf.if %2 {
      %cst_15 = arith.constant 0.000000e+00 : f32
      %21 = vector.broadcast %cst_15 : f32 to vector<2x128xf32>
      %c0_16 = arith.constant 0 : index
      %c0_17 = arith.constant 0 : index
      %22 = vector.load %arg7[%c0_16, %c0_17] : memref<2x128xf32, #tpu.memory_space<vmem>>, vector<2x128xf32>
      tpu.vector_store %arg7[%c0_16, %c0_17], %21 {strides = array<i32>} : memref<2x128xf32, #tpu.memory_space<vmem>>, vector<2x128xf32>,
    } else {
    }
    %c0_i32_1 = arith.constant 0 : i32
    %3 = arith.cmpi eq, %arg0, %c0_i32_1 : i32
    %c0_i32_2 = arith.constant 0 : i32
    %4 = arith.cmpi eq, %arg1, %c0_i32_2 : i32
    %5 = arith.andi %3, %4 : i1
    %6 = arith.extui %5 : i1 to i32
    %c0_i32_3 = arith.constant 0 : i32
    %7 = arith.cmpi ne, %6, %c0_i32_3 : i32
    scf.if %7 {
      %cst_15 = arith.constant 0.000000e+00 : f32
      %21 = vector.broadcast %cst_15 : f32 to vector<1x128xf32>
      %c0_16 = arith.constant 0 : index
      %c0_17 = arith.constant 0 : index
      %22 = vector.load %arg8[%c0_16, %c0_17] : memref<1x128xf32, #tpu.memory_space<vmem>>, vector<1x128xf32>
      tpu.vector_store %arg8[%c0_16, %c0_17], %21 {strides = array<i32>} : memref<1x128xf32, #tpu.memory_space<vmem>>, vector<1x128xf32>,
    } else {
    }
    %c0 = arith.constant 0 : index
    %c0_4 = arith.constant 0 : index
    %8 = vector.load %arg4[%c0, %c0_4] : memref<1024x128xbf16, #tpu.memory_space<vmem>>, vector<1024x128xbf16>
    %c0_5 = arith.constant 0 : index
    %c0_6 = arith.constant 0 : index
    %9 = vector.load %arg7[%c0_5, %c0_6] : memref<2x128xf32, #tpu.memory_space<vmem>>, vector<2x128xf32>
    %c0_7 = arith.constant 0 : index
    %c0_8 = arith.constant 0 : index
    %10 = vector.load %arg2[%c0_7, %c0_8] : memref<2x1024xf32, #tpu.memory_space<vmem>>, vector<2x1024xf32>
    %11 = arith.truncf %10 : vector<2x1024xf32> to vector<2x1024xbf16>
    %cst = arith.constant dense<0.000000e+00> : vector<2x128xf32>
    %12 = tpu.matmul %11, %8, %cst {dimension_numbers = #tpu.dot_dimension_numbers<[1], [0], [0], [1], [0, 0, 1, 1], [], []>} : vector<2x1024xbf16>, vector<1024x128xbf16>, vector<2x128xf32> -> vector<2x128xf32>
    %13 = arith.addf %9, %12 : vector<2x128xf32>
    %c0_9 = arith.constant 0 : index
    %c0_10 = arith.constant 0 : index
    %14 = vector.load %arg7[%c0_9, %c0_10] : memref<2x128xf32, #tpu.memory_space<vmem>>, vector<2x128xf32>
    tpu.vector_store %arg7[%c0_9, %c0_10], %13 {strides = array<i32>} : memref<2x128xf32, #tpu.memory_space<vmem>>, vector<2x128xf32>,
    %c0_i32_11 = arith.constant 0 : i32
    %15 = arith.cmpi eq, %arg0, %c0_i32_11 : i32
    %16 = arith.extui %15 : i1 to i32
    %c0_i32_12 = arith.constant 0 : i32
    %17 = arith.cmpi ne, %16, %c0_i32_12 : i32
    scf.if %17 {
      %c0_15 = arith.constant 0 : index
      %c0_16 = arith.constant 0 : index
      %21 = vector.load %arg8[%c0_15, %c0_16] : memref<1x128xf32, #tpu.memory_space<vmem>>, vector<1x128xf32>
      %c0_17 = arith.constant 0 : index
      %c0_18 = arith.constant 0 : index
      %22 = vector.load %arg3[%c0_17, %c0_18] : memref<1x1024xf32, #tpu.memory_space<vmem>>, vector<1x1024xf32>
      %23 = arith.truncf %22 : vector<1x1024xf32> to vector<1x1024xbf16>
      %cst_19 = arith.constant dense<0.000000e+00> : vector<1x128xf32>
      %24 = tpu.matmul %23, %8, %cst_19 {dimension_numbers = #tpu.dot_dimension_numbers<[1], [0], [0], [1], [0, 0, 1, 1], [], []>} : vector<1x1024xbf16>, vector<1024x128xbf16>, vector<1x128xf32> -> vector<1x128xf32>
      %25 = arith.addf %21, %24 : vector<1x128xf32>
      %c0_20 = arith.constant 0 : index
      %c0_21 = arith.constant 0 : index
      %26 = vector.load %arg8[%c0_20, %c0_21] : memref<1x128xf32, #tpu.memory_space<vmem>>, vector<1x128xf32>
      tpu.vector_store %arg8[%c0_20, %c0_21], %25 {strides = array<i32>} : memref<1x128xf32, #tpu.memory_space<vmem>>, vector<1x128xf32>,
    } else {
    }
    %c0_i32_13 = arith.constant 0 : i32
    %18 = arith.cmpi eq, %arg1, %c0_i32_13 : i32
    %19 = arith.extui %18 : i1 to i32
    %c0_i32_14 = arith.constant 0 : i32
    %20 = arith.cmpi ne, %19, %c0_i32_14 : i32
    scf.if %20 {
      %c0_15 = arith.constant 0 : index
      %c0_16 = arith.constant 0 : index
      %21 = vector.load %arg5[%c0_15, %c0_16] : memref<1x128xf32, #tpu.memory_space<vmem>>, vector<1x128xf32>
      %c0_17 = arith.constant 0 : index
      %c0_18 = arith.constant 0 : index
      %22 = vector.load %arg7[%c0_17, %c0_18] : memref<2x128xf32, #tpu.memory_space<vmem>>, vector<2x128xf32>
      %23 = vector.broadcast %21 : vector<1x128xf32> to vector<2x128xf32>
      %24 = arith.addf %22, %23 : vector<2x128xf32>
      %c0_19 = arith.constant 0 : index
      %c0_20 = arith.constant 0 : index
      %25 = vector.load %arg8[%c0_19, %c0_20] : memref<1x128xf32, #tpu.memory_space<vmem>>, vector<1x128xf32>
      %26 = arith.addf %25, %21 : vector<1x128xf32>
      %27 = vector.broadcast %26 : vector<1x128xf32> to vector<2x128xf32>
      %28 = arith.mulf %24, %27 : vector<2x128xf32>
      %cst_21 = arith.constant dense<0.000000e+00> : vector<2xf32>
      %29 = vector.multi_reduction <add>, %28, %cst_21 [1] : vector<2x128xf32> to vector<2xf32>
      %30 = vector.shape_cast %29 : vector<2xf32> to vector<2x1xf32>
      %31 = arith.mulf %24, %24 : vector<2x128xf32>
      %cst_22 = arith.constant dense<0.000000e+00> : vector<2xf32>
      %32 = vector.multi_reduction <add>, %31, %cst_22 [1] : vector<2x128xf32> to vector<2xf32>
      %33 = vector.shape_cast %32 : vector<2xf32> to vector<2x1xf32>
      %34 = arith.mulf %26, %26 : vector<1x128xf32>
      %cst_23 = arith.constant dense<0.000000e+00> : vector<1xf32>
      %35 = vector.multi_reduction <add>, %34, %cst_23 [1] : vector<1x128xf32> to vector<1xf32>
      %36 = vector.shape_cast %35 : vector<1xf32> to vector<1x1xf32>
      %37 = vector.broadcast %36 : vector<1x1xf32> to vector<2x1xf32>
      %38 = arith.mulf %33, %37 : vector<2x1xf32>
      %cst_24 = arith.constant 9.99999996E-13 : f32
      %39 = vector.broadcast %cst_24 : f32 to vector<2x1xf32>
      %40 = arith.maximumf %38, %39 : vector<2x1xf32>
      %41 = math.rsqrt %40 : vector<2x1xf32>
      %42 = arith.mulf %30, %41 : vector<2x1xf32>
      %cst_25 = arith.constant 1.000000e+00 : f32
      %43 = vector.broadcast %cst_25 : f32 to vector<2x1xf32>
      %44 = arith.subf %43, %42 : vector<2x1xf32>
      %c2_i32 = arith.constant 2 : i32
      %45 = arith.muli %arg0, %c2_i32 : i32
      %46 = tpu.iota {dimensions = array<i32: 0>} : vector<2x1xi32>
      %47 = vector.broadcast %45 : i32 to vector<2x1xi32>
      %48 = arith.addi %47, %46 : vector<2x1xi32>
      %c2_i32_26 = arith.constant 2 : i32
      %49 = vector.broadcast %c2_i32_26 : i32 to vector<2x1xi32>
      %50 = arith.cmpi slt, %48, %49 : vector<2x1xi32>
      %cst_27 = arith.constant 0.000000e+00 : f32
      %51 = vector.broadcast %cst_27 : f32 to vector<2x1xf32>
      %52 = arith.select %50, %44, %51 : vector<2x1xi1>, vector<2x1xf32>
      %53 = vector.shape_cast %52 : vector<2x1xf32> to vector<1x2x1xf32>
      %cst_28 = arith.constant dense<0.000000e+00> : vector<1xf32>
      %54 = vector.multi_reduction <add>, %53, %cst_28 [1, 2] : vector<1x2x1xf32> to vector<1xf32>
      %55 = vector.shape_cast %54 : vector<1xf32> to vector<1x1x1xf32>
      %56 = vector.extract %55[0, 0, 0] : f32 from vector<1x1x1xf32>
      %57 = vector.broadcast %56 : f32 to vector<1x8x128xf32>
      %c0_29 = arith.constant 0 : index
      %c0_30 = arith.constant 0 : index
      %c0_31 = arith.constant 0 : index
      %58 = vector.load %arg6[%c0_29, %c0_30, %c0_31] : memref<1x8x128xf32, #tpu.memory_space<vmem>>, vector<1x8x128xf32>
      tpu.vector_store %arg6[%c0_29, %c0_30, %c0_31], %57 {strides = array<i32>} : memref<1x8x128xf32, #tpu.memory_space<vmem>>, vector<1x8x128xf32>,
    } else {
    }
    return
  }
  func.func @transform_0(%arg0: i32, %arg1: i32) -> (i32, i32) {
    %c0_i32 = arith.constant 0 : i32
    return %arg0, %arg1 : i32, i32
  }
  func.func @transform_1(%arg0: i32, %arg1: i32) -> (i32, i32) {
    %c0_i32 = arith.constant 0 : i32
    %c0_i32_0 = arith.constant 0 : i32
    return %c0_i32, %arg1 : i32, i32
  }
  func.func @transform_2(%arg0: i32, %arg1: i32) -> (i32, i32) {
    %c0_i32 = arith.constant 0 : i32
    %c0_i32_0 = arith.constant 0 : i32
    return %arg1, %c0_i32 : i32, i32
  }
  func.func @transform_3(%arg0: i32, %arg1: i32) -> (i32, i32) {
    %c0_i32 = arith.constant 0 : i32
    %c0_i32_0 = arith.constant 0 : i32
    %c0_i32_1 = arith.constant 0 : i32
    return %c0_i32, %c0_i32_0 : i32, i32
  }
  func.func @transform_4(%arg0: i32, %arg1: i32) -> (i32, i32, i32) {
    %c0_i32 = arith.constant 0 : i32
    %c0_i32_0 = arith.constant 0 : i32
    %c0_i32_1 = arith.constant 0 : i32
    return %arg0, %c0_i32, %c0_i32_0 : i32, i32, i32
  }
}

</mosaic_0001>

<llo_original>
// kernel: clip_loss_forward.1
$region0: #{clip_loss_forward.1}
  #allocation0 [shape = 'u32[]', space=smem, size = 0x4, offset = 0x4, fixed_abs, tag = 'smem constant byte address 0x4 - core index']
  #allocation1 [shape = 'u32[144,128]{1,0:T(1,128)}', space=vmem, size = 0x12000, scoped, tag = 'internal scratch']
  #allocation2 [shape = 'f32[2,128]{1,0:T(2,128)}', space=vmem, size = 0x400, scoped, tag = 'scratch operand']
  #allocation3 [shape = 'f32[1,128]{1,0:T(1,128)}', space=vmem, size = 0x200, scoped, tag = 'scratch operand']
  %s0 = inlined_call_operand.vmem [shape: f32[2,1024], index: 0, kind: input, shape index: {}]
  %s1 = inlined_call_operand.vmem [shape: f32[1,1024], index: 1, kind: input, shape index: {}]
  %s2 = inlined_call_operand.vmem [shape: bf16[1024,128], index: 2, kind: input, shape index: {}]
  %s3 = inlined_call_operand.vmem [shape: f32[1,128], index: 3, kind: input, shape index: {}]
  %s4 = inlined_call_operand.vmem [shape: f32[1,8,128], index: 4, kind: output, shape index: {}]
  %s5 = sld [smem:[#allocation0]]
  $region42: #{clip_loss_forward.1} parent=0
    _
  %s7 = ssub.s32 1, %s5
  %s8 = scalar_select 0, %s7, %s5
  // Predicated region
  $region2: #{clip_loss_forward.1} parent=0 // pred_check
    _
  $region3: #{clip_loss_forward.1} parent=0 // pred_check_branch
    %10 = sbr.rel (0) target = $region5
  $region4: #{clip_loss_forward.1} parent=0 // pred_region
    _
  $region5: #{clip_loss_forward.1} parent=0 // pred_fallthru
    _
  // Predicated region
  $region6: #{clip_loss_forward.1} parent=0 // pred_check
    _
  $region7: #{clip_loss_forward.1} parent=0 // pred_check_branch
    %12 = sbr.rel (0) target = $region9
  $region8: #{clip_loss_forward.1} parent=0 // pred_region
    _
  $region9: #{clip_loss_forward.1} parent=0 // pred_fallthru
    _
  // Predicated region
  $region10: #{clip_loss_forward.1} parent=0 // pred_check
    _
  $region11: #{clip_loss_forward.1} parent=0 // pred_check_branch
    %14 = sbr.rel (0) target = $region13
  $region12: #{clip_loss_forward.1} parent=0 // pred_region
    _
  $region13: #{clip_loss_forward.1} parent=0 // pred_fallthru
    _
  // Predicated region
  $region14: #{clip_loss_forward.1} parent=0 // pred_check
    _
  $region15: #{clip_loss_forward.1} parent=0 // pred_check_branch
    %16 = sbr.rel (0) target = $region17
  $region16: #{clip_loss_forward.1} parent=0 // pred_region
    _
  $region17: #{clip_loss_forward.1} parent=0 // pred_fallthru
    _
  %p18 = scmp.eq.s32.totalorder 0, 0
  // Predicated region
  $region18: #{clip_loss_forward.1} parent=0 // pred_check
    %p19 = pneg %p18
  $region19: #{clip_loss_forward.1} parent=0 // pred_check_branch
    %21 = sbr.rel (%p19) target = $region21
  $region20: #{clip_loss_forward.1} parent=0 // pred_region
    %22 = vst [vmem:[#allocation2] sm:$0x3] 0.0
  $region21: #{clip_loss_forward.1} parent=0 // pred_fallthru
    _
  %p23 = scmp.eq.s32.totalorder 0, 0
  %p24 = pnand %p23, %p18
  %p25 = pneg %p24
  // Predicated region
  $region22: #{clip_loss_forward.1} parent=0 // pred_check
    _
  $region23: #{clip_loss_forward.1} parent=0 // pred_check_branch
    %27 = sbr.rel (%p24) target = $region25
  $region24: #{clip_loss_forward.1} parent=0 // pred_region
    %28 = vst [vmem:[#allocation3] sm:$0x1] 0.0
  $region25: #{clip_loss_forward.1} parent=0 // pred_fallthru
    _
  %v29 = vld [vmem:[%s2] sm:$0xf]
  %v30 = vld [vmem:[%s2 + $0x4] sm:$0xf]
  %v31 = vld [vmem:[%s2 + $0x8] sm:$0xf]
  %v32 = vld [vmem:[%s2 + $0xc] sm:$0xf]
  %v33 = vld [vmem:[%s2 + $0x10] sm:$0xf]
  %v34 = vld [vmem:[%s2 + $0x14] sm:$0xf]
  %v35 = vld [vmem:[%s2 + $0x18] sm:$0xf]
  %v36 = vld [vmem:[%s2 + $0x1c] sm:$0xf]
  %v37 = vld [vmem:[%s2 + $0x20] sm:$0xf]
  %v38 = vld [vmem:[%s2 + $0x24] sm:$0xf]
  %v39 = vld [vmem:[%s2 + $0x28] sm:$0xf]
  %v40 = vld [vmem:[%s2 + $0x2c] sm:$0xf]
  %v41 = vld [vmem:[%s2 + $0x30] sm:$0xf]
  %v42 = vld [vmem:[%s2 + $0x34] sm:$0xf]
  %v43 = vld [vmem:[%s2 + $0x38] sm:$0xf]
  %v44 = vld [vmem:[%s2 + $0x3c] sm:$0xf]
  %v45 = vld [vmem:[%s2 + $0x40] sm:$0xf]
  %v46 = vld [vmem:[%s2 + $0x44] sm:$0xf]
  %v47 = vld [vmem:[%s2 + $0x48] sm:$0xf]
  %v48 = vld [vmem:[%s2 + $0x4c] sm:$0xf]
  %v49 = vld [vmem:[%s2 + $0x50] sm:$0xf]
  %v50 = vld [vmem:[%s2 + $0x54] sm:$0xf]
  %v51 = vld [vmem:[%s2 + $0x58] sm:$0xf]
  %v52 = vld [vmem:[%s2 + $0x5c] sm:$0xf]
  %v53 = vld [vmem:[%s2 + $0x60] sm:$0xf]
  %v54 = vld [vmem:[%s2 + $0x64] sm:$0xf]
  %v55 = vld [vmem:[%s2 + $0x68] sm:$0xf]
  %v56 = vld [vmem:[%s2 + $0x6c] sm:$0xf]
  %v57 = vld [vmem:[%s2 + $0x70] sm:$0xf]
  %v58 = vld [vmem:[%s2 + $0x74] sm:$0xf]
  %v59 = vld [vmem:[%s2 + $0x78] sm:$0xf]
  %v60 = vld [vmem:[%s2 + $0x7c] sm:$0xf]
  %v61 = vld [vmem:[%s2 + $0x80] sm:$0xf]
  %v62 = vld [vmem:[%s2 + $0x84] sm:$0xf]
  %v63 = vld [vmem:[%s2 + $0x88] sm:$0xf]
  %v64 = vld [vmem:[%s2 + $0x8c] sm:$0xf]
  %v65 = vld [vmem:[%s2 + $0x90] sm:$0xf]
  %v66 = vld [vmem:[%s2 + $0x94] sm:$0xf]
  %v67 = vld [vmem:[%s2 + $0x98] sm:$0xf]
  %v68 = vld [vmem:[%s2 + $0x9c] sm:$0xf]
  %v69 = vld [vmem:[%s2 + $0xa0] sm:$0xf]
  %v70 = vld [vmem:[%s2 + $0xa4] sm:$0xf]
  %v71 = vld [vmem:[%s2 + $0xa8] sm:$0xf]
  %v72 = vld [vmem:[%s2 + $0xac] sm:$0xf]
  %v73 = vld [vmem:[%s2 + $0xb0] sm:$0xf]
  %v74 = vld [vmem:[%s2 + $0xb4] sm:$0xf]
  %v75 = vld [vmem:[%s2 + $0xb8] sm:$0xf]
  %v76 = vld [vmem:[%s2 + $0xbc] sm:$0xf]
  %v77 = vld [vmem:[%s2 + $0xc0] sm:$0xf]
  %v78 = vld [vmem:[%s2 + $0xc4] sm:$0xf]
  %v79 = vld [vmem:[%s2 + $0xc8] sm:$0xf]
  %v80 = vld [vmem:[%s2 + $0xcc] sm:$0xf]
  %v81 = vld [vmem:[%s2 + $0xd0] sm:$0xf]
  %v82 = vld [vmem:[%s2 + $0xd4] sm:$0xf]
  %v83 = vld [vmem:[%s2 + $0xd8] sm:$0xf]
  %v84 = vld [vmem:[%s2 + $0xdc] sm:$0xf]
  %v85 = vld [vmem:[%s2 + $0xe0] sm:$0xf]
  %v86 = vld [vmem:[%s2 + $0xe4] sm:$0xf]
  %v87 = vld [vmem:[%s2 + $0xe8] sm:$0xf]
  %v88 = vld [vmem:[%s2 + $0xec] sm:$0xf]
  %v89 = vld [vmem:[%s2 + $0xf0] sm:$0xf]
  %v90 = vld [vmem:[%s2 + $0xf4] sm:$0xf]
  %v91 = vld [vmem:[%s2 + $0xf8] sm:$0xf]
  %v92 = vld [vmem:[%s2 + $0xfc] sm:$0xf]
  %v93 = vld [vmem:[%s2 + $0x100] sm:$0xf]
  %v94 = vld [vmem:[%s2 + $0x104] sm:$0xf]
  %v95 = vld [vmem:[%s2 + $0x108] sm:$0xf]
  %v96 = vld [vmem:[%s2 + $0x10c] sm:$0xf]
  %v97 = vld [vmem:[%s2 + $0x110] sm:$0xf]
  %v98 = vld [vmem:[%s2 + $0x114] sm:$0xf]
  %v99 = vld [vmem:[%s2 + $0x118] sm:$0xf]
  %v100 = vld [vmem:[%s2 + $0x11c] sm:$0xf]
  %v101 = vld [vmem:[%s2 + $0x120] sm:$0xf]
  %v102 = vld [vmem:[%s2 + $0x124] sm:$0xf]
  %v103 = vld [vmem:[%s2 + $0x128] sm:$0xf]
  %v104 = vld [vmem:[%s2 + $0x12c] sm:$0xf]
  %v105 = vld [vmem:[%s2 + $0x130] sm:$0xf]
  %v106 = vld [vmem:[%s2 + $0x134] sm:$0xf]
  %v107 = vld [vmem:[%s2 + $0x138] sm:$0xf]
  %v108 = vld [vmem:[%s2 + $0x13c] sm:$0xf]
  %v109 = vld [vmem:[%s2 + $0x140] sm:$0xf]
  %v110 = vld [vmem:[%s2 + $0x144] sm:$0xf]
  %v111 = vld [vmem:[%s2 + $0x148] sm:$0xf]
  %v112 = vld [vmem:[%s2 + $0x14c] sm:$0xf]
  %v113 = vld [vmem:[%s2 + $0x150] sm:$0xf]
  %v114 = vld [vmem:[%s2 + $0x154] sm:$0xf]
  %v115 = vld [vmem:[%s2 + $0x158] sm:$0xf]
  %v116 = vld [vmem:[%s2 + $0x15c] sm:$0xf]
  %v117 = vld [vmem:[%s2 + $0x160] sm:$0xf]
  %v118 = vld [vmem:[%s2 + $0x164] sm:$0xf]
  %v119 = vld [vmem:[%s2 + $0x168] sm:$0xf]
  %v120 = vld [vmem:[%s2 + $0x16c] sm:$0xf]
  %v121 = vld [vmem:[%s2 + $0x170] sm:$0xf]
  %v122 = vld [vmem:[%s2 + $0x174] sm:$0xf]
  %v123 = vld [vmem:[%s2 + $0x178] sm:$0xf]
  %v124 = vld [vmem:[%s2 + $0x17c] sm:$0xf]
  %v125 = vld [vmem:[%s2 + $0x180] sm:$0xf]
  %v126 = vld [vmem:[%s2 + $0x184] sm:$0xf]
  %v127 = vld [vmem:[%s2 + $0x188] sm:$0xf]
  %v128 = vld [vmem:[%s2 + $0x18c] sm:$0xf]
  %v129 = vld [vmem:[%s2 + $0x190] sm:$0xf]
  %v130 = vld [vmem:[%s2 + $0x194] sm:$0xf]
  %v131 = vld [vmem:[%s2 + $0x198] sm:$0xf]
  %v132 = vld [vmem:[%s2 + $0x19c] sm:$0xf]
  %v133 = vld [vmem:[%s2 + $0x1a0] sm:$0xf]
  %v134 = vld [vmem:[%s2 + $0x1a4] sm:$0xf]
  %v135 = vld [vmem:[%s2 + $0x1a8] sm:$0xf]
  %v136 = vld [vmem:[%s2 + $0x1ac] sm:$0xf]
  %v137 = vld [vmem:[%s2 + $0x1b0] sm:$0xf]
  %v138 = vld [vmem:[%s2 + $0x1b4] sm:$0xf]
  %v139 = vld [vmem:[%s2 + $0x1b8] sm:$0xf]
  %v140 = vld [vmem:[%s2 + $0x1bc] sm:$0xf]
  %v141 = vld [vmem:[%s2 + $0x1c0] sm:$0xf]
  %v142 = vld [vmem:[%s2 + $0x1c4] sm:$0xf]
  %v143 = vld [vmem:[%s2 + $0x1c8] sm:$0xf]
  %v144 = vld [vmem:[%s2 + $0x1cc] sm:$0xf]
  %v145 = vld [vmem:[%s2 + $0x1d0] sm:$0xf]
  %v146 = vld [vmem:[%s2 + $0x1d4] sm:$0xf]
  %v147 = vld [vmem:[%s2 + $0x1d8] sm:$0xf]
  %v148 = vld [vmem:[%s2 + $0x1dc] sm:$0xf]
  %v149 = vld [vmem:[%s2 + $0x1e0] sm:$0xf]
  %v150 = vld [vmem:[%s2 + $0x1e4] sm:$0xf]
  %v151 = vld [vmem:[%s2 + $0x1e8] sm:$0xf]
  %v152 = vld [vmem:[%s2 + $0x1ec] sm:$0xf]
  %v153 = vld [vmem:[%s2 + $0x1f0] sm:$0xf]
  %v154 = vld [vmem:[%s2 + $0x1f4] sm:$0xf]
  %v155 = vld [vmem:[%s2 + $0x1f8] sm:$0xf]
  %v156 = vld [vmem:[%s2 + $0x1fc] sm:$0xf]
  %v157 = vld [vmem:[#allocation2] sm:$0x3]
  %v158 = vld [vmem:[%s0] sm:$0xff]
  %v159 = vld [vmem:[%s0 + $0x8] sm:$0xff]
  %v162 = vcombine.high %v158, %v158
  %v164 = vunpack.c.l.s4 1983009808
  %v165 = vunpack.c.0.s8 %v164
  %v166 = vlaneseq
  %v167 = vshrl.u32 %v166, 7
  %v168 = vsub.s32 %v165, %v167
  %v169 = vrot.slane %v158, %v168
  %v171 = vunpack.c.l.s4 1983009808
  %v172 = vunpack.c.0.s8 %v171
  %v173 = vlaneseq
  %v174 = vshrl.u32 %v173, 7
  %v175 = vsub.s32 %v172, %v174
  %v176 = vrot.slane %v162, %v175
  %v177 = vcombine.high %v169, %v169
  %v178 = vcombine.high %v176, %v176
  %v179 = vcombine.high %v159, %v159
  %v181 = vunpack.c.l.s4 1983009808
  %v182 = vunpack.c.0.s8 %v181
  %v183 = vlaneseq
  %v184 = vshrl.u32 %v183, 7
  %v185 = vsub.s32 %v182, %v184
  %v186 = vrot.slane %v159, %v185
  %v188 = vunpack.c.l.s4 1983009808
  %v189 = vunpack.c.0.s8 %v188
  %v190 = vlaneseq
  %v191 = vshrl.u32 %v190, 7
  %v192 = vsub.s32 %v189, %v191
  %v193 = vrot.slane %v179, %v192
  %v194 = vcombine.high %v186, %v186
  %v195 = vcombine.high %v193, %v193
  %v204 = vpack.c.bf16 %v169, %v169
  %v205 = vpack.c.bf16 %v177, %v177
  %v206 = vpack.c.bf16 %v176, %v176
  %v207 = vpack.c.bf16 %v178, %v178
  %v208 = vpack.c.bf16 %v186, %v186
  %v209 = vpack.c.bf16 %v194, %v194
  %v210 = vpack.c.bf16 %v193, %v193
  %v211 = vpack.c.bf16 %v195, %v195
  %v340 = vunpack.c.l.b16 %v29
  %v341 = vunpack.c.l.b16 %v30
  %v342 = vunpack.c.l.b16 %v31
  %v343 = vunpack.c.l.b16 %v32
  %v344 = vunpack.c.l.b16 %v33
  %v345 = vunpack.c.l.b16 %v34
  %v346 = vunpack.c.l.b16 %v35
  %v347 = vunpack.c.l.b16 %v36
  %v348 = vunpack.c.l.b16 %v37
  %v349 = vunpack.c.l.b16 %v38
  %v350 = vunpack.c.l.b16 %v39
  %v351 = vunpack.c.l.b16 %v40
  %v352 = vunpack.c.l.b16 %v41
  %v353 = vunpack.c.l.b16 %v42
  %v354 = vunpack.c.l.b16 %v43
  %v355 = vunpack.c.l.b16 %v44
  %v356 = vunpack.c.l.b16 %v45
  %v357 = vunpack.c.l.b16 %v46
  %v358 = vunpack.c.l.b16 %v47
  %v359 = vunpack.c.l.b16 %v48
  %v360 = vunpack.c.l.b16 %v49
  %v361 = vunpack.c.l.b16 %v50
  %v362 = vunpack.c.l.b16 %v51
  %v363 = vunpack.c.l.b16 %v52
  %v364 = vunpack.c.l.b16 %v53
  %v365 = vunpack.c.l.b16 %v54
  %v366 = vunpack.c.l.b16 %v55
  %v367 = vunpack.c.l.b16 %v56
  %v368 = vunpack.c.l.b16 %v57
  %v369 = vunpack.c.l.b16 %v58
  %v370 = vunpack.c.l.b16 %v59
  %v371 = vunpack.c.l.b16 %v60
  %v372 = vunpack.c.l.b16 %v61
  %v373 = vunpack.c.l.b16 %v62
  %v374 = vunpack.c.l.b16 %v63
  %v375 = vunpack.c.l.b16 %v64
  %v376 = vunpack.c.l.b16 %v65
  %v377 = vunpack.c.l.b16 %v66
  %v378 = vunpack.c.l.b16 %v67
  %v379 = vunpack.c.l.b16 %v68
  %v380 = vunpack.c.l.b16 %v69
  %v381 = vunpack.c.l.b16 %v70
  %v382 = vunpack.c.l.b16 %v71
  %v383 = vunpack.c.l.b16 %v72
  %v384 = vunpack.c.l.b16 %v73
  %v385 = vunpack.c.l.b16 %v74
  %v386 = vunpack.c.l.b16 %v75
  %v387 = vunpack.c.l.b16 %v76
  %v388 = vunpack.c.l.b16 %v77
  %v389 = vunpack.c.l.b16 %v78
  %v390 = vunpack.c.l.b16 %v79
  %v391 = vunpack.c.l.b16 %v80
  %v392 = vunpack.c.l.b16 %v81
  %v393 = vunpack.c.l.b16 %v82
  %v394 = vunpack.c.l.b16 %v83
  %v395 = vunpack.c.l.b16 %v84
  %v396 = vunpack.c.l.b16 %v85
  %v397 = vunpack.c.l.b16 %v86
  %v398 = vunpack.c.l.b16 %v87
  %v399 = vunpack.c.l.b16 %v88
  %v400 = vunpack.c.l.b16 %v89
  %v401 = vunpack.c.l.b16 %v90
  %v402 = vunpack.c.l.b16 %v91
  %v403 = vunpack.c.l.b16 %v92
  %v404 = vunpack.c.l.b16 %v93
  %v405 = vunpack.c.l.b16 %v94
  %v406 = vunpack.c.l.b16 %v95
  %v407 = vunpack.c.l.b16 %v96
  %v408 = vunpack.c.l.b16 %v97
  %v409 = vunpack.c.l.b16 %v98
  %v410 = vunpack.c.l.b16 %v99
  %v411 = vunpack.c.l.b16 %v100
  %v412 = vunpack.c.l.b16 %v101
  %v413 = vunpack.c.l.b16 %v102
  %v414 = vunpack.c.l.b16 %v103
  %v415 = vunpack.c.l.b16 %v104
  %v416 = vunpack.c.l.b16 %v105
  %v417 = vunpack.c.l.b16 %v106
  %v418 = vunpack.c.l.b16 %v107
  %v419 = vunpack.c.l.b16 %v108
  %v420 = vunpack.c.l.b16 %v109
  %v421 = vunpack.c.l.b16 %v110
  %v422 = vunpack.c.l.b16 %v111
  %v423 = vunpack.c.l.b16 %v112
  %v424 = vunpack.c.l.b16 %v113
  %v425 = vunpack.c.l.b16 %v114
  %v426 = vunpack.c.l.b16 %v115
  %v427 = vunpack.c.l.b16 %v116
  %v428 = vunpack.c.l.b16 %v117
  %v429 = vunpack.c.l.b16 %v118
  %v430 = vunpack.c.l.b16 %v119
  %v431 = vunpack.c.l.b16 %v120
  %v432 = vunpack.c.l.b16 %v121
  %v433 = vunpack.c.l.b16 %v122
  %v434 = vunpack.c.l.b16 %v123
  %v435 = vunpack.c.l.b16 %v124
  %v436 = vunpack.c.l.b16 %v125
  %v437 = vunpack.c.l.b16 %v126
  %v438 = vunpack.c.l.b16 %v127
  %v439 = vunpack.c.l.b16 %v128
  %v440 = vunpack.c.l.b16 %v129
  %v441 = vunpack.c.l.b16 %v130
  %v442 = vunpack.c.l.b16 %v131
  %v443 = vunpack.c.l.b16 %v132
  %v444 = vunpack.c.l.b16 %v133
  %v445 = vunpack.c.l.b16 %v134
  %v446 = vunpack.c.l.b16 %v135
  %v447 = vunpack.c.l.b16 %v136
  %v448 = vunpack.c.l.b16 %v137
  %v449 = vunpack.c.l.b16 %v138
  %v450 = vunpack.c.l.b16 %v139
  %v451 = vunpack.c.l.b16 %v140
  %v452 = vunpack.c.l.b16 %v141
  %v453 = vunpack.c.l.b16 %v142
  %v454 = vunpack.c.l.b16 %v143
  %v455 = vunpack.c.l.b16 %v144
  %v456 = vunpack.c.l.b16 %v145
  %v457 = vunpack.c.l.b16 %v146
  %v458 = vunpack.c.l.b16 %v147
  %v459 = vunpack.c.l.b16 %v148
  %v460 = vunpack.c.l.b16 %v149
  %v461 = vunpack.c.l.b16 %v150
  %v462 = vunpack.c.l.b16 %v151
  %v463 = vunpack.c.l.b16 %v152
  %v464 = vunpack.c.l.b16 %v153
  %v465 = vunpack.c.l.b16 %v154
  %v466 = vunpack.c.l.b16 %v155
  %v467 = vunpack.c.l.b16 %v156
  %v468 = vpack.c.b16 %v341, %v340
  %v469 = vpack.c.b16 %v343, %v342
  %v470 = vpack.c.b16 %v345, %v344
  %v471 = vpack.c.b16 %v347, %v346
  %v472 = vpack.c.b16 %v349, %v348
  %v473 = vpack.c.b16 %v351, %v350
  %v474 = vpack.c.b16 %v353, %v352
  %v475 = vpack.c.b16 %v355, %v354
  %v476 = vpack.c.b16 %v357, %v356
  %v477 = vpack.c.b16 %v359, %v358
  %v478 = vpack.c.b16 %v361, %v360
  %v479 = vpack.c.b16 %v363, %v362
  %v480 = vpack.c.b16 %v365, %v364
  %v481 = vpack.c.b16 %v367, %v366
  %v482 = vpack.c.b16 %v369, %v368
  %v483 = vpack.c.b16 %v371, %v370
  %v484 = vpack.c.b16 %v373, %v372
  %v485 = vpack.c.b16 %v375, %v374
  %v486 = vpack.c.b16 %v377, %v376
  %v487 = vpack.c.b16 %v379, %v378
  %v488 = vpack.c.b16 %v381, %v380
  %v489 = vpack.c.b16 %v383, %v382
  %v490 = vpack.c.b16 %v385, %v384
  %v491 = vpack.c.b16 %v387, %v386
  %v492 = vpack.c.b16 %v389, %v388
  %v493 = vpack.c.b16 %v391, %v390
  %v494 = vpack.c.b16 %v393, %v392
  %v495 = vpack.c.b16 %v395, %v394
  %v496 = vpack.c.b16 %v397, %v396
  %v497 = vpack.c.b16 %v399, %v398
  %v498 = vpack.c.b16 %v401, %v400
  %v499 = vpack.c.b16 %v403, %v402
  %v500 = vpack.c.b16 %v405, %v404
  %v501 = vpack.c.b16 %v407, %v406
  %v502 = vpack.c.b16 %v409, %v408
  %v503 = vpack.c.b16 %v411, %v410
  %v504 = vpack.c.b16 %v413, %v412
  %v505 = vpack.c.b16 %v415, %v414
  %v506 = vpack.c.b16 %v417, %v416
  %v507 = vpack.c.b16 %v419, %v418
  %v508 = vpack.c.b16 %v421, %v420
  %v509 = vpack.c.b16 %v423, %v422
  %v510 = vpack.c.b16 %v425, %v424
  %v511 = vpack.c.b16 %v427, %v426
  %v512 = vpack.c.b16 %v429, %v428
  %v513 = vpack.c.b16 %v431, %v430
  %v514 = vpack.c.b16 %v433, %v432
  %v515 = vpack.c.b16 %v435, %v434
  %v516 = vpack.c.b16 %v437, %v436
  %v517 = vpack.c.b16 %v439, %v438
  %v518 = vpack.c.b16 %v441, %v440
  %v519 = vpack.c.b16 %v443, %v442
  %v520 = vpack.c.b16 %v445, %v444
  %v521 = vpack.c.b16 %v447, %v446
  %v522 = vpack.c.b16 %v449, %v448
  %v523 = vpack.c.b16 %v451, %v450
  %v524 = vpack.c.b16 %v453, %v452
  %v525 = vpack.c.b16 %v455, %v454
  %v526 = vpack.c.b16 %v457, %v456
  %v527 = vpack.c.b16 %v459, %v458
  %v528 = vpack.c.b16 %v461, %v460
  %v529 = vpack.c.b16 %v463, %v462
  %v530 = vpack.c.b16 %v465, %v464
  %v531 = vpack.c.b16 %v467, %v466
  %596 = vmatprep.subr.bf16.mxu0 0
  %597 = vmatpush1.bf16.msra.mxu0 %v475
  %598 = vmatprep.subr.bf16.mxu0 0
  %599 = vmatpush1.bf16.msra.mxu0 %v474
  %600 = vmatprep.subr.bf16.mxu0 0
  %601 = vmatpush1.bf16.msra.mxu0 %v473
  %602 = vmatprep.subr.bf16.mxu0 0
  %603 = vmatpush1.bf16.msra.mxu0 %v472
  %604 = vmatprep.subr.bf16.mxu0 0
  %605 = vmatpush1.bf16.msra.mxu0 %v471
  %606 = vmatprep.subr.bf16.mxu0 0
  %607 = vmatpush1.bf16.msra.mxu0 %v470
  %608 = vmatprep.subr.bf16.mxu0 0
  %609 = vmatpush1.bf16.msra.mxu0 %v469
  %610 = vmatprep.subr.bf16.mxu0 0
  %611 = vmatpush1.bf16.msra.mxu0 %v468
  %612 = vmatprep.subr.bf16.mxu0 0
  %613 = vmatpush2.bf16.msra.mxu0 %v483
  %614 = vmatprep.subr.bf16.mxu0 0
  %615 = vmatpush2.bf16.msra.mxu0 %v482
  %616 = vmatprep.subr.bf16.mxu0 0
  %617 = vmatpush2.bf16.msra.mxu0 %v481
  %618 = vmatprep.subr.bf16.mxu0 0
  %619 = vmatpush2.bf16.msra.mxu0 %v480
  %620 = vmatprep.subr.bf16.mxu0 0
  %621 = vmatpush2.bf16.msra.mxu0 %v479
  %622 = vmatprep.subr.bf16.mxu0 0
  %623 = vmatpush2.bf16.msra.mxu0 %v478
  %624 = vmatprep.subr.bf16.mxu0 0
  %625 = vmatpush2.bf16.msra.mxu0 %v477
  %626 = vmatprep.subr.bf16.mxu0 0
  %627 = vmatpush2.bf16.msra.mxu0 %v476
  %628 = vmatprep.mubr.bf16.mxu0 %v205
  %629 = vmatmul.mubr.bf16.gmra.mxu0 %v204
  %v630 = vpop.f32.mrf.mxu0
  %v631 = vadd.f32 0.0, %v630
  %v632 = vpop.f32.mrf.mxu0
  %v633 = vpop.f32.mrf.mxu0
  %v634 = vpop.f32.mrf.mxu0
  %635 = vdwg.mxu0
  %636 = vmatprep.subr.bf16.mxu0 0
  %637 = vmatpush1.bf16.msra.mxu0 %v491
  %638 = vmatprep.subr.bf16.mxu0 0
  %639 = vmatpush1.bf16.msra.mxu0 %v490
  %640 = vmatprep.subr.bf16.mxu0 0
  %641 = vmatpush1.bf16.msra.mxu0 %v489
  %642 = vmatprep.subr.bf16.mxu0 0
  %643 = vmatpush1.bf16.msra.mxu0 %v488
  %644 = vmatprep.subr.bf16.mxu0 0
  %645 = vmatpush1.bf16.msra.mxu0 %v487
  %646 = vmatprep.subr.bf16.mxu0 0
  %647 = vmatpush1.bf16.msra.mxu0 %v486
  %648 = vmatprep.subr.bf16.mxu0 0
  %649 = vmatpush1.bf16.msra.mxu0 %v485
  %650 = vmatprep.subr.bf16.mxu0 0
  %651 = vmatpush1.bf16.msra.mxu0 %v484
  %652 = vmatprep.subr.bf16.mxu0 0
  %653 = vmatpush2.bf16.msra.mxu0 %v499
  %654 = vmatprep.subr.bf16.mxu0 0
  %655 = vmatpush2.bf16.msra.mxu0 %v498
  %656 = vmatprep.subr.bf16.mxu0 0
  %657 = vmatpush2.bf16.msra.mxu0 %v497
  %658 = vmatprep.subr.bf16.mxu0 0
  %659 = vmatpush2.bf16.msra.mxu0 %v496
  %660 = vmatprep.subr.bf16.mxu0 0
  %661 = vmatpush2.bf16.msra.mxu0 %v495
  %662 = vmatprep.subr.bf16.mxu0 0
  %663 = vmatpush2.bf16.msra.mxu0 %v494
  %664 = vmatprep.subr.bf16.mxu0 0
  %665 = vmatpush2.bf16.msra.mxu0 %v493
  %666 = vmatprep.subr.bf16.mxu0 0
  %667 = vmatpush2.bf16.msra.mxu0 %v492
  %668 = vmatprep.mubr.bf16.mxu0 %v207
  %669 = vmatmul.mubr.bf16.gmra.mxu0 %v206
  %v670 = vpop.f32.mrf.mxu0
  %v671 = vadd.f32 %v631, %v670
  %v672 = vpop.f32.mrf.mxu0
  %v673 = vpop.f32.mrf.mxu0
  %v674 = vpop.f32.mrf.mxu0
  %675 = vdwg.mxu0
  %676 = vmatprep.subr.bf16.mxu0 0
  %677 = vmatpush1.bf16.msra.mxu0 %v507
  %678 = vmatprep.subr.bf16.mxu0 0
  %679 = vmatpush1.bf16.msra.mxu0 %v506
  %680 = vmatprep.subr.bf16.mxu0 0
  %681 = vmatpush1.bf16.msra.mxu0 %v505
  %682 = vmatprep.subr.bf16.mxu0 0
  %683 = vmatpush1.bf16.msra.mxu0 %v504
  %684 = vmatprep.subr.bf16.mxu0 0
  %685 = vmatpush1.bf16.msra.mxu0 %v503
  %686 = vmatprep.subr.bf16.mxu0 0
  %687 = vmatpush1.bf16.msra.mxu0 %v502
  %688 = vmatprep.subr.bf16.mxu0 0
  %689 = vmatpush1.bf16.msra.mxu0 %v501
  %690 = vmatprep.subr.bf16.mxu0 0
  %691 = vmatpush1.bf16.msra.mxu0 %v500
  %692 = vmatprep.subr.bf16.mxu0 0
  %693 = vmatpush2.bf16.msra.mxu0 %v515
  %694 = vmatprep.subr.bf16.mxu0 0
  %695 = vmatpush2.bf16.msra.mxu0 %v514
  %696 = vmatprep.subr.bf16.mxu0 0
  %697 = vmatpush2.bf16.msra.mxu0 %v513
  %698 = vmatprep.subr.bf16.mxu0 0
  %699 = vmatpush2.bf16.msra.mxu0 %v512
  %700 = vmatprep.subr.bf16.mxu0 0
  %701 = vmatpush2.bf16.msra.mxu0 %v511
  %702 = vmatprep.subr.bf16.mxu0 0
  %703 = vmatpush2.bf16.msra.mxu0 %v510
  %704 = vmatprep.subr.bf16.mxu0 0
  %705 = vmatpush2.bf16.msra.mxu0 %v509
  %706 = vmatprep.subr.bf16.mxu0 0
  %707 = vmatpush2.bf16.msra.mxu0 %v508
  %708 = vmatprep.mubr.bf16.mxu0 %v209
  %709 = vmatmul.mubr.bf16.gmra.mxu0 %v208
  %v710 = vpop.f32.mrf.mxu0
  %v711 = vadd.f32 %v671, %v710
  %v712 = vpop.f32.mrf.mxu0
  %v713 = vpop.f32.mrf.mxu0
  %v714 = vpop.f32.mrf.mxu0
  %715 = vdwg.mxu0
  %716 = vmatprep.subr.bf16.mxu0 0
  %717 = vmatpush1.bf16.msra.mxu0 %v523
  %718 = vmatprep.subr.bf16.mxu0 0
  %719 = vmatpush1.bf16.msra.mxu0 %v522
  %720 = vmatprep.subr.bf16.mxu0 0
  %721 = vmatpush1.bf16.msra.mxu0 %v521
  %722 = vmatprep.subr.bf16.mxu0 0
  %723 = vmatpush1.bf16.msra.mxu0 %v520
  %724 = vmatprep.subr.bf16.mxu0 0
  %725 = vmatpush1.bf16.msra.mxu0 %v519
  %726 = vmatprep.subr.bf16.mxu0 0
  %727 = vmatpush1.bf16.msra.mxu0 %v518
  %728 = vmatprep.subr.bf16.mxu0 0
  %729 = vmatpush1.bf16.msra.mxu0 %v517
  %730 = vmatprep.subr.bf16.mxu0 0
  %731 = vmatpush1.bf16.msra.mxu0 %v516
  %732 = vmatprep.subr.bf16.mxu0 0
  %733 = vmatpush2.bf16.msra.mxu0 %v531
  %734 = vmatprep.subr.bf16.mxu0 0
  %735 = vmatpush2.bf16.msra.mxu0 %v530
  %736 = vmatprep.subr.bf16.mxu0 0
  %737 = vmatpush2.bf16.msra.mxu0 %v529
  %738 = vmatprep.subr.bf16.mxu0 0
  %739 = vmatpush2.bf16.msra.mxu0 %v528
  %740 = vmatprep.subr.bf16.mxu0 0
  %741 = vmatpush2.bf16.msra.mxu0 %v527
  %742 = vmatprep.subr.bf16.mxu0 0
  %743 = vmatpush2.bf16.msra.mxu0 %v526
  %744 = vmatprep.subr.bf16.mxu0 0
  %745 = vmatpush2.bf16.msra.mxu0 %v525
  %746 = vmatprep.subr.bf16.mxu0 0
  %747 = vmatpush2.bf16.msra.mxu0 %v524
  %748 = vmatprep.mubr.bf16.mxu0 %v211
  %749 = vmatmul.mubr.bf16.gmra.mxu0 %v210
  %v750 = vpop.f32.mrf.mxu0
  %v751 = vadd.f32 %v711, %v750
  %v752 = vpop.f32.mrf.mxu0
  %v753 = vpop.f32.mrf.mxu0
  %v754 = vpop.f32.mrf.mxu0
  %755 = vdwg.mxu0
  %v756 = vadd.f32 %v157, %v751
  %757 = vst [vmem:[#allocation2] sm:$0x3] %v756
  // Predicated region
  $region26: #{clip_loss_forward.1} parent=0 // pred_check
    %p758 = pneg %p23
  $region27: #{clip_loss_forward.1} parent=0 // pred_check_branch
    %760 = sbr.rel (%p758) target = $region29
  $region28: #{clip_loss_forward.1} parent=0 // pred_region
    %v761 = vld [vmem:[#allocation3] sm:$0x1]
    %v762 = vld [vmem:[%s1] sm:$0xff]
    %v764 = vlaneseq
    %v765 = vshrl.u32 %v764, 7
    %v766 = vsub.s32 0, %v765
    %v767 = vrot.slane %v762, %v766
    %v768 = vlaneseq
    %v769 = vshrl.u32 %v768, 7
    %v770 = vsub.s32 1, %v769
    %v771 = vrot.slane %v762, %v770
    %v772 = vlaneseq
    %v773 = vshrl.u32 %v772, 7
    %v774 = vsub.s32 2, %v773
    %v775 = vrot.slane %v762, %v774
    %v776 = vlaneseq
    %v777 = vshrl.u32 %v776, 7
    %v778 = vsub.s32 3, %v777
    %v779 = vrot.slane %v762, %v778
    %v780 = vlaneseq
    %v781 = vshrl.u32 %v780, 7
    %v782 = vsub.s32 4, %v781
    %v783 = vrot.slane %v762, %v782
    %v784 = vlaneseq
    %v785 = vshrl.u32 %v784, 7
    %v786 = vsub.s32 5, %v785
    %v787 = vrot.slane %v762, %v786
    %v788 = vlaneseq
    %v789 = vshrl.u32 %v788, 7
    %v790 = vsub.s32 6, %v789
    %v791 = vrot.slane %v762, %v790
    %v792 = vlaneseq
    %v793 = vshrl.u32 %v792, 7
    %v794 = vsub.s32 7, %v793
    %v795 = vrot.slane %v762, %v794
    %v804 = vpack.c.bf16 %v767, %v767
    %v805 = vpack.c.bf16 %v771, %v771
    %v806 = vpack.c.bf16 %v775, %v775
    %v807 = vpack.c.bf16 %v779, %v779
    %v808 = vpack.c.bf16 %v783, %v783
    %v809 = vpack.c.bf16 %v787, %v787
    %v810 = vpack.c.bf16 %v791, %v791
    %v811 = vpack.c.bf16 %v795, %v795
    %812 = vmatprep.subr.bf16.mxu0 0
    %813 = vmatpush1.bf16.msra.mxu0 %v475
    %814 = vmatprep.subr.bf16.mxu0 0
    %815 = vmatpush1.bf16.msra.mxu0 %v474
    %816 = vmatprep.subr.bf16.mxu0 0
    %817 = vmatpush1.bf16.msra.mxu0 %v473
    %818 = vmatprep.subr.bf16.mxu0 0
    %819 = vmatpush1.bf16.msra.mxu0 %v472
    %820 = vmatprep.subr.bf16.mxu0 0
    %821 = vmatpush1.bf16.msra.mxu0 %v471
    %822 = vmatprep.subr.bf16.mxu0 0
    %823 = vmatpush1.bf16.msra.mxu0 %v470
    %824 = vmatprep.subr.bf16.mxu0 0
    %825 = vmatpush1.bf16.msra.mxu0 %v469
    %826 = vmatprep.subr.bf16.mxu0 0
    %827 = vmatpush1.bf16.msra.mxu0 %v468
    %828 = vmatprep.subr.bf16.mxu0 0
    %829 = vmatpush2.bf16.msra.mxu0 %v483
    %830 = vmatprep.subr.bf16.mxu0 0
    %831 = vmatpush2.bf16.msra.mxu0 %v482
    %832 = vmatprep.subr.bf16.mxu0 0
    %833 = vmatpush2.bf16.msra.mxu0 %v481
    %834 = vmatprep.subr.bf16.mxu0 0
    %835 = vmatpush2.bf16.msra.mxu0 %v480
    %836 = vmatprep.subr.bf16.mxu0 0
    %837 = vmatpush2.bf16.msra.mxu0 %v479
    %838 = vmatprep.subr.bf16.mxu0 0
    %839 = vmatpush2.bf16.msra.mxu0 %v478
    %840 = vmatprep.subr.bf16.mxu0 0
    %841 = vmatpush2.bf16.msra.mxu0 %v477
    %842 = vmatprep.subr.bf16.mxu0 0
    %843 = vmatpush2.bf16.msra.mxu0 %v476
    %844 = vmatprep.mubr.bf16.mxu0 %v805
    %845 = vmatmul.mubr.bf16.gmra.mxu0 %v804
    %v846 = vpop.f32.mrf.mxu0
    %v847 = vadd.f32 0.0, %v846
    %v848 = vpop.f32.mrf.mxu0
    %v849 = vpop.f32.mrf.mxu0
    %v850 = vpop.f32.mrf.mxu0
    %851 = vdwg.mxu0
    %852 = vmatprep.subr.bf16.mxu0 0
    %853 = vmatpush1.bf16.msra.mxu0 %v491
    %854 = vmatprep.subr.bf16.mxu0 0
    %855 = vmatpush1.bf16.msra.mxu0 %v490
    %856 = vmatprep.subr.bf16.mxu0 0
    %857 = vmatpush1.bf16.msra.mxu0 %v489
    %858 = vmatprep.subr.bf16.mxu0 0
    %859 = vmatpush1.bf16.msra.mxu0 %v488
    %860 = vmatprep.subr.bf16.mxu0 0
    %861 = vmatpush1.bf16.msra.mxu0 %v487
    %862 = vmatprep.subr.bf16.mxu0 0
    %863 = vmatpush1.bf16.msra.mxu0 %v486
    %864 = vmatprep.subr.bf16.mxu0 0
    %865 = vmatpush1.bf16.msra.mxu0 %v485
    %866 = vmatprep.subr.bf16.mxu0 0
    %867 = vmatpush1.bf16.msra.mxu0 %v484
    %868 = vmatprep.subr.bf16.mxu0 0
    %869 = vmatpush2.bf16.msra.mxu0 %v499
    %870 = vmatprep.subr.bf16.mxu0 0
    %871 = vmatpush2.bf16.msra.mxu0 %v498
    %872 = vmatprep.subr.bf16.mxu0 0
    %873 = vmatpush2.bf16.msra.mxu0 %v497
    %874 = vmatprep.subr.bf16.mxu0 0
    %875 = vmatpush2.bf16.msra.mxu0 %v496
    %876 = vmatprep.subr.bf16.mxu0 0
    %877 = vmatpush2.bf16.msra.mxu0 %v495
    %878 = vmatprep.subr.bf16.mxu0 0
    %879 = vmatpush2.bf16.msra.mxu0 %v494
    %880 = vmatprep.subr.bf16.mxu0 0
    %881 = vmatpush2.bf16.msra.mxu0 %v493
    %882 = vmatprep.subr.bf16.mxu0 0
    %883 = vmatpush2.bf16.msra.mxu0 %v492
    %884 = vmatprep.mubr.bf16.mxu0 %v807
    %885 = vmatmul.mubr.bf16.gmra.mxu0 %v806
    %v886 = vpop.f32.mrf.mxu0
    %v887 = vadd.f32 %v847, %v886
    %v888 = vpop.f32.mrf.mxu0
    %v889 = vpop.f32.mrf.mxu0
    %v890 = vpop.f32.mrf.mxu0
    %891 = vdwg.mxu0
    %892 = vmatprep.subr.bf16.mxu0 0
    %893 = vmatpush1.bf16.msra.mxu0 %v507
    %894 = vmatprep.subr.bf16.mxu0 0
    %895 = vmatpush1.bf16.msra.mxu0 %v506
    %896 = vmatprep.subr.bf16.mxu0 0
    %897 = vmatpush1.bf16.msra.mxu0 %v505
    %898 = vmatprep.subr.bf16.mxu0 0
    %899 = vmatpush1.bf16.msra.mxu0 %v504
    %900 = vmatprep.subr.bf16.mxu0 0
    %901 = vmatpush1.bf16.msra.mxu0 %v503
    %902 = vmatprep.subr.bf16.mxu0 0
    %903 = vmatpush1.bf16.msra.mxu0 %v502
    %904 = vmatprep.subr.bf16.mxu0 0
    %905 = vmatpush1.bf16.msra.mxu0 %v501
    %906 = vmatprep.subr.bf16.mxu0 0
    %907 = vmatpush1.bf16.msra.mxu0 %v500
    %908 = vmatprep.subr.bf16.mxu0 0
    %909 = vmatpush2.bf16.msra.mxu0 %v515
    %910 = vmatprep.subr.bf16.mxu0 0
    %911 = vmatpush2.bf16.msra.mxu0 %v514
    %912 = vmatprep.subr.bf16.mxu0 0
    %913 = vmatpush2.bf16.msra.mxu0 %v513
    %914 = vmatprep.subr.bf16.mxu0 0
    %915 = vmatpush2.bf16.msra.mxu0 %v512
    %916 = vmatprep.subr.bf16.mxu0 0
    %917 = vmatpush2.bf16.msra.mxu0 %v511
    %918 = vmatprep.subr.bf16.mxu0 0
    %919 = vmatpush2.bf16.msra.mxu0 %v510
    %920 = vmatprep.subr.bf16.mxu0 0
    %921 = vmatpush2.bf16.msra.mxu0 %v509
    %922 = vmatprep.subr.bf16.mxu0 0
    %923 = vmatpush2.bf16.msra.mxu0 %v508
    %924 = vmatprep.mubr.bf16.mxu0 %v809
    %925 = vmatmul.mubr.bf16.gmra.mxu0 %v808
    %v926 = vpop.f32.mrf.mxu0
    %v927 = vadd.f32 %v887, %v926
    %v928 = vpop.f32.mrf.mxu0
    %v929 = vpop.f32.mrf.mxu0
    %v930 = vpop.f32.mrf.mxu0
    %931 = vdwg.mxu0
    %932 = vmatprep.subr.bf16.mxu0 0
    %933 = vmatpush1.bf16.msra.mxu0 %v523
    %934 = vmatprep.subr.bf16.mxu0 0
    %935 = vmatpush1.bf16.msra.mxu0 %v522
    %936 = vmatprep.subr.bf16.mxu0 0
    %937 = vmatpush1.bf16.msra.mxu0 %v521
    %938 = vmatprep.subr.bf16.mxu0 0
    %939 = vmatpush1.bf16.msra.mxu0 %v520
    %940 = vmatprep.subr.bf16.mxu0 0
    %941 = vmatpush1.bf16.msra.mxu0 %v519
    %942 = vmatprep.subr.bf16.mxu0 0
    %943 = vmatpush1.bf16.msra.mxu0 %v518
    %944 = vmatprep.subr.bf16.mxu0 0
    %945 = vmatpush1.bf16.msra.mxu0 %v517
    %946 = vmatprep.subr.bf16.mxu0 0
    %947 = vmatpush1.bf16.msra.mxu0 %v516
    %948 = vmatprep.subr.bf16.mxu0 0
    %949 = vmatpush2.bf16.msra.mxu0 %v531
    %950 = vmatprep.subr.bf16.mxu0 0
    %951 = vmatpush2.bf16.msra.mxu0 %v530
    %952 = vmatprep.subr.bf16.mxu0 0
    %953 = vmatpush2.bf16.msra.mxu0 %v529
    %954 = vmatprep.subr.bf16.mxu0 0
    %955 = vmatpush2.bf16.msra.mxu0 %v528
    %956 = vmatprep.subr.bf16.mxu0 0
    %957 = vmatpush2.bf16.msra.mxu0 %v527
    %958 = vmatprep.subr.bf16.mxu0 0
    %959 = vmatpush2.bf16.msra.mxu0 %v526
    %960 = vmatprep.subr.bf16.mxu0 0
    %961 = vmatpush2.bf16.msra.mxu0 %v525
    %962 = vmatprep.subr.bf16.mxu0 0
    %963 = vmatpush2.bf16.msra.mxu0 %v524
    %964 = vmatprep.mubr.bf16.mxu0 %v811
    %965 = vmatmul.mubr.bf16.gmra.mxu0 %v810
    %v966 = vpop.f32.mrf.mxu0
    %v967 = vadd.f32 %v927, %v966
    %v968 = vpop.f32.mrf.mxu0
    %v969 = vpop.f32.mrf.mxu0
    %v970 = vpop.f32.mrf.mxu0
    %971 = vdwg.mxu0
    %v972 = vadd.f32 %v761, %v967
    %973 = vst [vmem:[#allocation3] sm:$0x1] %v972
  $region29: #{clip_loss_forward.1} parent=0 // pred_fallthru
    _
  // Predicated region
  $region30: #{clip_loss_forward.1} parent=0 // pred_check
    %p974 = pneg %p18
  $region31: #{clip_loss_forward.1} parent=0 // pred_check_branch
    %976 = sbr.rel (%p974) target = $region33
  $region32: #{clip_loss_forward.1} parent=0 // pred_region
    %v977 = vld [vmem:[%s3] sm:$0x1]
    %v978 = vld [vmem:[#allocation2] sm:$0x3]
    %v980 = vlaneseq
    %v981 = vshrl.u32 %v980, 7
    %v982 = vsub.s32 0, %v981
    %v983 = vrot.slane %v977, %v982
    %v985 = vadd.f32 %v978, %v983
    %v986 = vld [vmem:[#allocation3] sm:$0x1]
    %v987 = vadd.f32 %v986, %v977
    %v989 = vlaneseq
    %v990 = vshrl.u32 %v989, 7
    %v991 = vsub.s32 0, %v990
    %v992 = vrot.slane %v987, %v991
    %v994 = vmul.f32 %v985, %v992
    %vm995 = vcmask 1041408
    %v996 = vsel %vm995, %v994, 0.0
    %997 = vadd.xlane.f32.xlu0 %v996
    %v998 = vpop.xlane.xlu0 %997
    %v999 = vmul.f32 %v985, %v985
    %v1000 = vsel %vm995, %v999, 0.0
    %1001 = vadd.xlane.f32.xlu0 %v1000
    %v1002 = vpop.xlane.xlu0 %1001
    %v1003 = vmul.f32 %v987, %v987
    %vm1004 = vcmask 1040384
    %v1005 = vsel %vm1004, %v1003, 0.0
    %1006 = vadd.xlane.f32.xlu0 %v1005
    %v1007 = vpop.xlane.xlu0 %1006
    %v1008 = vlaneseq
    %v1009 = vshrl.u32 %v1008, 7
    %v1010 = vsub.s32 0, %v1009
    %v1011 = vrot.slane %v1007, %v1010
    %v1012 = vmul.f32 %v1002, %v1011
    %v1013 = vmax.f32 %v1012, 1e-12
    %v1014 = vrsqrt.pop %v1013
    %v1015 = vmul.f32 %v998, %v1014
    %v1016 = vsub.f32 1.0, %v1015
    %s1017 = smul.u32 0, 2
    %v1018 = vlaneseq
    %v1019 = vshrl.u32 %v1018, 7
    %v1020 = vstv %s1017
    %v1021 = vadd.s32 %v1020, %v1019
    %vm1022 = vcmp.lt.s32.totalorder %v1021, 2
    %v1023 = vsel %vm1022, %v1016, 0.0
    %vm1024 = vcmask 1024
    %v1025 = vsel %vm1024, %v1023, 0.0
    %1026 = vadd.xlane.f32.xlu0 %v1025
    %v1027 = vpop.xlane.xlu0 %1026
    %v1028 = vrot.slane %v1027, 4
    %v1029 = vadd.f32 %v1027, %v1028
    %v1030 = vrot.slane %v1029, 2
    %v1031 = vadd.f32 %v1029, %v1030
    %v1032 = vrot.slane %v1031, 1
    %v1033 = vadd.f32 %v1031, %v1032
    %s1034 = vtos %v1033
    %v1035 = vstv %s1034
    %1036 = vst [vmem:[%s4] sm:$0xff] %v1035
  $region33: #{clip_loss_forward.1} parent=0 // pred_fallthru
    _
  // Predicated region
  $region34: #{clip_loss_forward.1} parent=0 // pred_check
    _
  $region35: #{clip_loss_forward.1} parent=0 // pred_check_branch
    %1038 = sbr.rel (0) target = $region37
  $region36: #{clip_loss_forward.1} parent=0 // pred_region
    _
  $region37: #{clip_loss_forward.1} parent=0 // pred_fallthru
    _
  // Predicated region
  $region38: #{clip_loss_forward.1} parent=0 // pred_check
    _
  $region39: #{clip_loss_forward.1} parent=0 // pred_check_branch
    %1040 = sbr.rel (0) target = $region41
  $region40: #{clip_loss_forward.1} parent=0 // pred_region
    _
  $region41: #{clip_loss_forward.1} parent=0 // pred_fallthru
    _

</llo_original>
